<compile_context>
chip_gen: v7x
topology: tpu7x:2x2x1
jax: 0.10.0
libtpu: 0.0.40
codegen_flags: <defaults>
</compile_context>

<pallas_src>
import jax
import jax.numpy as jnp
from jax import lax
from jax.experimental import pallas as pl
from jax.experimental.pallas import tpu as pltpu

IN_DIM = 784
HID = 256
OUT_DIM = 1
NEG_SLOPE = 0.2


def _leaky_relu(x, slope=NEG_SLOPE):
    return jnp.where(x > 0, x, slope * x)


def discriminator_kernel(x_ref, w1_ref, b1_ref, w2_ref, b2_ref, w3_ref, b3_ref,
                         o_ref):
    # x should arrive as bf16 (caller-provided); the astype is then a no-op.
    x = x_ref[...].astype(jnp.bfloat16)

    h1 = jnp.dot(x, w1_ref[...], preferred_element_type=jnp.float32) + b1_ref[...]
    h1 = _leaky_relu(h1)

    h2 = jnp.dot(h1.astype(jnp.bfloat16), w2_ref[...],
                 preferred_element_type=jnp.float32) + b2_ref[...]
    h2 = _leaky_relu(h2)

    # Layer 3 (256 -> 1), restructured so the OUTPUT is lane-dense:
    # contract the hidden axis of the (1, 256) weight row against the hidden
    # axis of (bt, 256) h2, giving a (1, bt) logit row.  M=1 matmul is
    # negligible FLOPs and avoids both the N=1 MXU drain and masked (bt, 1)
    # partial stores.
    logit = lax.dot_general(
        w3_ref[...], h2.astype(jnp.bfloat16),
        dimension_numbers=(((1,), (1,)), ((), ())),
        preferred_element_type=jnp.float32)            # (1, bt)
    logit = logit + b3_ref[0, 0]                       # scalar bias from SMEM

    # Numerically stable sigmoid: exp(-|x|) + approximate reciprocal, both on
    # the EUP slot (free next to MXU/VPU work); no inf intermediates.
    e = jnp.exp(-jnp.abs(logit))
    num = jnp.where(logit >= 0, 1.0, e)
    o_ref[...] = (num * pl.reciprocal(1.0 + e, approx=True)).astype(o_ref.dtype)


def _round_up(a, m):
    return pl.cdiv(a, m) * m


def discriminator_forward(x, params, *, batch_tile=1024):
    """x: (B, 784), ideally bfloat16 (the kernel is HBM-bandwidth-bound on the
    x stream; bf16 input halves the dominant DMA).  f32 x also works, just
    slower.  Returns (B, 1) float32 probabilities."""
    w1, b1, w2, b2, w3, b3 = params
    assert x.ndim == 2 and x.shape[1] == IN_DIM
    B = x.shape[0]

    if B <= 256:
        # Small batch: one grid step, pad only to a multiple of 8 sublanes.
        bt = _round_up(B, 8)
    else:
        # Large batch: >= 2 grid steps so the "parallel" batch axis shards
        # across v7x's two TensorCores; 256-row tiles keep full MXU passes;
        # cap at batch_tile (default 1024 amortizes per-step overhead and
        # fits comfortably in VMEM with bf16 x on all generations).
        bt = min(_round_up(batch_tile, 256), _round_up(pl.cdiv(B, 2), 256))
    b_pad = _round_up(B, bt)
    if b_pad != B:
        x = jnp.pad(x, ((0, b_pad - B), (0, 0)))

    grid = (b_pad // bt,)

    # Weights/biases use a constant (0, 0) block index -> VMEM resident across
    # all grid steps; only x / out are tiled along the batch axis.
    const_spec = lambda shape: pl.BlockSpec(shape, lambda i: (0, 0))

    out_row = pl.pallas_call(
        discriminator_kernel,
        out_shape=jax.ShapeDtypeStruct((1, b_pad), jnp.float32),
        grid=grid,
        in_specs=[
            pl.BlockSpec((bt, IN_DIM), lambda i: (i, 0)),        # x   (bf16)
            const_spec((IN_DIM, HID)),                           # w1  (bf16)
            const_spec((1, HID)),                                # b1  (f32)
            const_spec((HID, HID)),                              # w2  (bf16)
            const_spec((1, HID)),                                # b2  (f32)
            const_spec((1, HID)),                                # w3 row (bf16)
            pl.BlockSpec(memory_space=pltpu.MemorySpace.SMEM),   # b3 scalar
        ],
        out_specs=pl.BlockSpec((1, bt), lambda i: (0, i)),       # lane-dense
        compiler_params=pltpu.CompilerParams(
            dimension_semantics=("parallel",)),
    )(x, w1, b1, w2, b2, w3, b3)

    return out_row[0, :B][:, None]


def init_params(key):
    """PyTorch nn.Linear default init: U(-1/sqrt(fan_in), 1/sqrt(fan_in)).
    Weights stored as (in, out); w1/w2/w3 kept in bf16 (MXU input dtype),
    b3 stored as a (1, 1) f32 scalar for SMEM."""
    ks = jax.random.split(key, 6)

    def linear(kw, kb, fan_in, fan_out):
        bound = 1.0 / jnp.sqrt(jnp.float32(fan_in))
        w = jax.random.uniform(kw, (fan_in, fan_out), jnp.float32, -bound, bound)
        b = jax.random.uniform(kb, (1, fan_out), jnp.float32, -bound, bound)
        return w, b

    w1, b1 = linear(ks[0], ks[1], IN_DIM, HID)
    w2, b2 = linear(ks[2], ks[3], HID, HID)
    w3, b3 = linear(ks[4], ks[5], HID, OUT_DIM)
    return (w1.astype(jnp.bfloat16), b1,
            w2.astype(jnp.bfloat16), b2,
            w3.T.astype(jnp.bfloat16),      # (1, HID) row
            b3.reshape(1, 1))


def reference_forward(x, params):
    """Pure-JAX reference using the same bf16-weight / f32-accumulate math."""
    w1, b1, w2, b2, w3, b3 = params
    h = jnp.dot(x.astype(jnp.bfloat16), w1,
                preferred_element_type=jnp.float32) + b1
    h = jnp.where(h > 0, h, NEG_SLOPE * h)
    h = jnp.dot(h.astype(jnp.bfloat16), w2,
                preferred_element_type=jnp.float32) + b2
    h = jnp.where(h > 0, h, NEG_SLOPE * h)
    logit = lax.dot_general(
        w3, h.astype(jnp.bfloat16),
        dimension_numbers=(((1,), (1,)), ((), ())),
        preferred_element_type=jnp.float32) + b3[0, 0]   # (1, B)
    return jax.nn.sigmoid(logit)[0][:, None]             # (B, 1)


if __name__ == "__main__":
    key = jax.random.PRNGKey(0)
    k_params, k_x, k_x2 = jax.random.split(key, 3)

    params = init_params(k_params)

    # Small batch of flattened 28x28 "images", produced directly in bf16 (the
    # kernel's native input dtype) so the dominant x DMA stream is half-width.
    B = 32
    x = jax.random.normal(k_x, (B, IN_DIM), jnp.bfloat16)

    out = jax.block_until_ready(discriminator_forward(x, params))
    ref = reference_forward(x, params)
    assert out.shape == (B, OUT_DIM)
    # The approximate (EUP) reciprocal in the sigmoid is ~12-bit accurate, so
    # the tolerance is relaxed accordingly.
    assert jnp.allclose(out, ref, atol=2e-3, rtol=2e-3), "small-batch mismatch"

    # Also exercise the multi-tile (grid >= 2, padded) large-batch path.
    B2 = 384
    x2 = jax.random.normal(k_x2, (B2, IN_DIM), jnp.bfloat16)
    out2 = jax.block_until_ready(discriminator_forward(x2, params))
    ref2 = reference_forward(x2, params)
    assert out2.shape == (B2, OUT_DIM)
    assert jnp.allclose(out2, ref2, atol=2e-3, rtol=2e-3), "multi-tile mismatch"

    print("KERNEL_OK")
</pallas_src>

<mosaic_0001>
module attributes {stable_mosaic.version = 11 : i64} {
  func.func @discriminator_kernel(%arg0: i32, %arg1: memref<32x784xbf16, #tpu.memory_space<vmem>>, %arg2: memref<784x256xbf16, #tpu.memory_space<vmem>>, %arg3: memref<1x256xf32, #tpu.memory_space<vmem>>, %arg4: memref<256x256xbf16, #tpu.memory_space<vmem>>, %arg5: memref<1x256xf32, #tpu.memory_space<vmem>>, %arg6: memref<1x256xbf16, #tpu.memory_space<vmem>>, %arg7: memref<1x1xf32, #tpu.memory_space<smem>>, %arg8: memref<1x32xf32, #tpu.memory_space<vmem>>) attributes {dimension_semantics = [#tpu.dimension_semantics<parallel>], iteration_bounds = array<i64: 1>, scalar_prefetch = 0 : i64, scratch_operands = 0 : i64, tpu.core_type = #tpu.core_type<tc>, window_params = [{transform_indices = @transform_0, window_bounds = array<i64: 32, 784>}, {pipeline_mode = #tpu.pipeline_mode<synchronous>, transform_indices = @transform_1, window_bounds = array<i64: 784, 256>}, {pipeline_mode = #tpu.pipeline_mode<synchronous>, transform_indices = @transform_2, window_bounds = array<i64: 1, 256>}, {pipeline_mode = #tpu.pipeline_mode<synchronous>, transform_indices = @transform_3, window_bounds = array<i64: 256, 256>}, {pipeline_mode = #tpu.pipeline_mode<synchronous>, transform_indices = @transform_4, window_bounds = array<i64: 1, 256>}, {pipeline_mode = #tpu.pipeline_mode<synchronous>, transform_indices = @transform_5, window_bounds = array<i64: 1, 256>}, {transform_indices = @transform_6, window_bounds = array<i64: 1, 1>}, {transform_indices = @transform_7, window_bounds = array<i64: 1, 32>}]} {
    %c0 = arith.constant 0 : index
    %c0_0 = arith.constant 0 : index
    %0 = vector.load %arg1[%c0, %c0_0] : memref<32x784xbf16, #tpu.memory_space<vmem>>, vector<32x784xbf16>
    %c0_1 = arith.constant 0 : index
    %c0_2 = arith.constant 0 : index
    %1 = vector.load %arg2[%c0_1, %c0_2] : memref<784x256xbf16, #tpu.memory_space<vmem>>, vector<784x256xbf16>
    %cst = arith.constant dense<0.000000e+00> : vector<32x256xf32>
    %2 = tpu.matmul %0, %1, %cst {dimension_numbers = #tpu.dot_dimension_numbers<[1], [0], [0], [1], [0, 0, 1, 1], [], []>} : vector<32x784xbf16>, vector<784x256xbf16>, vector<32x256xf32> -> vector<32x256xf32>
    %c0_3 = arith.constant 0 : index
    %c0_4 = arith.constant 0 : index
    %3 = vector.load %arg3[%c0_3, %c0_4] : memref<1x256xf32, #tpu.memory_space<vmem>>, vector<1x256xf32>
    %4 = vector.broadcast %3 : vector<1x256xf32> to vector<32x256xf32>
    %5 = arith.addf %2, %4 : vector<32x256xf32>
    %cst_5 = arith.constant 0.000000e+00 : f32
    %6 = vector.broadcast %cst_5 : f32 to vector<32x256xf32>
    %7 = arith.cmpf ogt, %5, %6 : vector<32x256xf32>
    %cst_6 = arith.constant 2.000000e-01 : f32
    %8 = vector.broadcast %cst_6 : f32 to vector<32x256xf32>
    %9 = arith.mulf %8, %5 : vector<32x256xf32>
    %10 = arith.select %7, %5, %9 : vector<32x256xi1>, vector<32x256xf32>
    %11 = arith.truncf %10 : vector<32x256xf32> to vector<32x256xbf16>
    %c0_7 = arith.constant 0 : index
    %c0_8 = arith.constant 0 : index
    %12 = vector.load %arg4[%c0_7, %c0_8] : memref<256x256xbf16, #tpu.memory_space<vmem>>, vector<256x256xbf16>
    %cst_9 = arith.constant dense<0.000000e+00> : vector<32x256xf32>
    %13 = tpu.matmul %11, %12, %cst_9 {dimension_numbers = #tpu.dot_dimension_numbers<[1], [0], [0], [1], [0, 0, 1, 1], [], []>} : vector<32x256xbf16>, vector<256x256xbf16>, vector<32x256xf32> -> vector<32x256xf32>
    %c0_10 = arith.constant 0 : index
    %c0_11 = arith.constant 0 : index
    %14 = vector.load %arg5[%c0_10, %c0_11] : memref<1x256xf32, #tpu.memory_space<vmem>>, vector<1x256xf32>
    %15 = vector.broadcast %14 : vector<1x256xf32> to vector<32x256xf32>
    %16 = arith.addf %13, %15 : vector<32x256xf32>
    %cst_12 = arith.constant 0.000000e+00 : f32
    %17 = vector.broadcast %cst_12 : f32 to vector<32x256xf32>
    %18 = arith.cmpf ogt, %16, %17 : vector<32x256xf32>
    %cst_13 = arith.constant 2.000000e-01 : f32
    %19 = vector.broadcast %cst_13 : f32 to vector<32x256xf32>
    %20 = arith.mulf %19, %16 : vector<32x256xf32>
    %21 = arith.select %18, %16, %20 : vector<32x256xi1>, vector<32x256xf32>
    %c0_14 = arith.constant 0 : index
    %c0_15 = arith.constant 0 : index
    %22 = vector.load %arg6[%c0_14, %c0_15] : memref<1x256xbf16, #tpu.memory_space<vmem>>, vector<1x256xbf16>
    %23 = arith.truncf %21 : vector<32x256xf32> to vector<32x256xbf16>
    %cst_16 = arith.constant dense<0.000000e+00> : vector<1x32xf32>
    %24 = tpu.matmul %22, %23, %cst_16 {dimension_numbers = #tpu.dot_dimension_numbers<[1], [1], [0], [0], [0, 0, 1, 0], [], []>} : vector<1x256xbf16>, vector<32x256xbf16>, vector<1x32xf32> -> vector<1x32xf32>
    %c0_17 = arith.constant 0 : index
    %c0_18 = arith.constant 0 : index
    %25 = memref.load %arg7[%c0_17, %c0_18] : memref<1x1xf32, #tpu.memory_space<smem>>
    %26 = vector.broadcast %25 : f32 to vector<1x32xf32>
    %27 = arith.addf %24, %26 : vector<1x32xf32>
    %28 = math.absf %27 : vector<1x32xf32>
    %cst_19 = arith.constant 0.000000e+00 : f32
    %29 = vector.broadcast %cst_19 : f32 to vector<1x32xf32>
    %30 = arith.subf %29, %28 : vector<1x32xf32>
    %31 = math.exp %30 : vector<1x32xf32>
    %cst_20 = arith.constant 0.000000e+00 : f32
    %32 = vector.broadcast %cst_20 : f32 to vector<1x32xf32>
    %33 = arith.cmpf oge, %27, %32 : vector<1x32xf32>
    %cst_21 = arith.constant 1.000000e+00 : f32
    %34 = vector.broadcast %cst_21 : f32 to vector<1x32xf32>
    %35 = arith.select %33, %34, %31 : vector<1x32xi1>, vector<1x32xf32>
    %cst_22 = arith.constant 1.000000e+00 : f32
    %36 = vector.broadcast %cst_22 : f32 to vector<1x32xf32>
    %37 = arith.addf %36, %31 : vector<1x32xf32>
    %38 = tpu.reciprocal %37 {approx = true} : vector<1x32xf32> -> vector<1x32xf32>
    %39 = arith.mulf %35, %38 : vector<1x32xf32>
    %c0_23 = arith.constant 0 : index
    %c0_24 = arith.constant 0 : index
    %40 = vector.load %arg8[%c0_23, %c0_24] : memref<1x32xf32, #tpu.memory_space<vmem>>, vector<1x32xf32>
    tpu.vector_store %arg8[%c0_23, %c0_24], %39 {strides = array<i32>} : memref<1x32xf32, #tpu.memory_space<vmem>>, vector<1x32xf32>,
    return
  }
  func.func @transform_0(%arg0: i32) -> (i32, i32) {
    %c0_i32 = arith.constant 0 : i32
    %c0_i32_0 = arith.constant 0 : i32
    return %arg0, %c0_i32 : i32, i32
  }
  func.func @transform_1(%arg0: i32) -> (i32, i32) {
    %c0_i32 = arith.constant 0 : i32
    %c0_i32_0 = arith.constant 0 : i32
    %c0_i32_1 = arith.constant 0 : i32
    return %c0_i32, %c0_i32_0 : i32, i32
  }
  func.func @transform_2(%arg0: i32) -> (i32, i32) {
    %c0_i32 = arith.constant 0 : i32
    %c0_i32_0 = arith.constant 0 : i32
    %c0_i32_1 = arith.constant 0 : i32
    return %c0_i32, %c0_i32_0 : i32, i32
  }
  func.func @transform_3(%arg0: i32) -> (i32, i32) {
    %c0_i32 = arith.constant 0 : i32
    %c0_i32_0 = arith.constant 0 : i32
    %c0_i32_1 = arith.constant 0 : i32
    return %c0_i32, %c0_i32_0 : i32, i32
  }
  func.func @transform_4(%arg0: i32) -> (i32, i32) {
    %c0_i32 = arith.constant 0 : i32
    %c0_i32_0 = arith.constant 0 : i32
    %c0_i32_1 = arith.constant 0 : i32
    return %c0_i32, %c0_i32_0 : i32, i32
  }
  func.func @transform_5(%arg0: i32) -> (i32, i32) {
    %c0_i32 = arith.constant 0 : i32
    %c0_i32_0 = arith.constant 0 : i32
    %c0_i32_1 = arith.constant 0 : i32
    return %c0_i32, %c0_i32_0 : i32, i32
  }
  func.func @transform_6(%arg0: i32) -> (i32, i32) {
    %c0_i32 = arith.constant 0 : i32
    %c0_i32_0 = arith.constant 0 : i32
    %c0_i32_1 = arith.constant 0 : i32
    return %c0_i32, %c0_i32_0 : i32, i32
  }
  func.func @transform_7(%arg0: i32) -> (i32, i32) {
    %c0_i32 = arith.constant 0 : i32
    %c0_i32_0 = arith.constant 0 : i32
    return %c0_i32, %arg0 : i32, i32
  }
}

</mosaic_0001>

<llo_original>
// kernel: tpu_custom_call.1
$region0: #{tpu_custom_call.1}
  #allocation0 [shape = 'u32[]', space=smem, size = 0x4, offset = 0x4, fixed_abs, tag = 'smem constant byte address 0x4 - core index']
  #allocation1 [shape = 'u32[144,128]{1,0:T(1,128)}', space=vmem, size = 0x12000, scoped, tag = 'internal scratch']
  #allocation2 [shape = 'f32[1,1]{1,0:T(1,128)S(6)}', space=smem, size = 0x200, scoped, tag = 'scoped memory for tpu_custom_call.1']
  %s0 = inlined_call_operand.hbm [shape: bf16[32,784], index: 0, kind: input, shape index: {}]
  %s1 = inlined_call_operand.hbm [shape: bf16[784,256], index: 1, kind: input, shape index: {}]
  %s2 = inlined_call_operand.vmem [shape: f32[1,256], index: 2, kind: input, shape index: {}]
  %s3 = inlined_call_operand.hbm [shape: bf16[256,256], index: 3, kind: input, shape index: {}]
  %s4 = inlined_call_operand.vmem [shape: f32[1,256], index: 4, kind: input, shape index: {}]
  %s5 = inlined_call_operand.vmem [shape: bf16[1,256], index: 5, kind: input, shape index: {}]
  %s6 = inlined_call_operand.<no memory space> [shape: f32[1,1], index: 6, kind: input, shape index: {}]
  %s7 = inlined_call_operand.hbm [shape: f32[1,32], index: 7, kind: output, shape index: {}]
  %s8 = sld [smem:[#allocation0]]
  $region50: #{tpu_custom_call.1} parent=0
    _
  %s10 = ssub.s32 1, %s8
  %s11 = scalar_select 0, %s10, %s8
  %12 = sst [smem:[#allocation2]] %s6
  $region1: #{tpu_custom_call.1} parent=0
    #allocation3 [shape = 'u8[57344]{0}', space=vmem, size = 0xe000, scoped, tag = 'input window, operand 0, single buffered']
    #allocation4 [shape = 's32[1]{0}', space=sflag, size = 0x4, scoped, tag = 'scoped memory for tpu_custom_call.1']
    #allocation5 [shape = 's32[1]{0}', space=sflag, size = 0x4, scoped, tag = 'scoped memory for tpu_custom_call.1']
    #allocation6 [shape = 'u8[401408]{0}', space=vmem, size = 0x62000, scoped, tag = 'input window, operand 1, single buffered']
    #allocation7 [shape = 's32[1]{0}', space=sflag, size = 0x4, scoped, tag = 'scoped memory for tpu_custom_call.1']
    #allocation8 [shape = 'u8[131072]{0}', space=vmem, size = 0x20000, scoped, tag = 'input window, operand 3, single buffered']
    #allocation9 [shape = 'u8[512]{0}', space=vmem, size = 0x400, scoped, tag = 'output window, operand 0, single buffered']
    %13 = vsyncpa [#allocation4], 0
    %14 = vsyncpa [#allocation7], 0
    %15 = vsyncpa [#allocation5], 0
    // Predicated region
    $region2: #{tpu_custom_call.1} parent=1 // pred_check
      _
    $region3: #{tpu_custom_call.1} parent=1 // pred_check_branch
      %17 = sbr.rel (0) target = $region5
    $region4: #{tpu_custom_call.1} parent=1 // pred_region
      %s19 = ssub.s32 1792, 1792
      %20 = vsyncadd [#allocation4], %s19
      %s21 = sshll.u32 [#allocation3], 4
      %s22 = int_to_ptr.vmem [resolvable:$true] %s21
      %27 = dma.hbm_to_vmem [thread:$0]  %s0, 1792, %s22, [#allocation4], 448, 448, 28
    $region5: #{tpu_custom_call.1} parent=1 // pred_fallthru
      _
    // Predicated region
    $region6: #{tpu_custom_call.1} parent=1 // pred_check
      _
    $region7: #{tpu_custom_call.1} parent=1 // pred_check_branch
      %29 = sbr.rel (0) target = $region9
    $region8: #{tpu_custom_call.1} parent=1 // pred_region
      %s31 = ssub.s32 12544, 12544
      %32 = vsyncadd [#allocation7], %s31
      %s33 = sshll.u32 [#allocation6], 4
      %s34 = int_to_ptr.vmem [resolvable:$true] %s33
      %39 = dma.hbm_to_vmem [thread:$0]  %s1, 12544, %s34, [#allocation7], 128, 128, 8
    $region9: #{tpu_custom_call.1} parent=1 // pred_fallthru
      _
    // Predicated region
    $region10: #{tpu_custom_call.1} parent=1 // pred_check
      _
    $region11: #{tpu_custom_call.1} parent=1 // pred_check_branch
      %41 = sbr.rel (0) target = $region13
    $region12: #{tpu_custom_call.1} parent=1 // pred_region
      _
    $region13: #{tpu_custom_call.1} parent=1 // pred_fallthru
      _
    // Predicated region
    $region14: #{tpu_custom_call.1} parent=1 // pred_check
      _
    $region15: #{tpu_custom_call.1} parent=1 // pred_check_branch
      %43 = sbr.rel (0) target = $region17
    $region16: #{tpu_custom_call.1} parent=1 // pred_region
      %s45 = ssub.s32 4096, 4096
      %46 = vsyncadd [#allocation7], %s45
      %s47 = sshll.u32 [#allocation8], 4
      %s48 = int_to_ptr.vmem [resolvable:$true] %s47
      %53 = dma.hbm_to_vmem [thread:$0]  %s3, 4096, %s48, [#allocation7], 128, 128, 8
    $region17: #{tpu_custom_call.1} parent=1 // pred_fallthru
      _
    // Predicated region
    $region18: #{tpu_custom_call.1} parent=1 // pred_check
      _
    $region19: #{tpu_custom_call.1} parent=1 // pred_check_branch
      %55 = sbr.rel (0) target = $region21
    $region20: #{tpu_custom_call.1} parent=1 // pred_region
      _
    $region21: #{tpu_custom_call.1} parent=1 // pred_fallthru
      _
    // Predicated region
    $region22: #{tpu_custom_call.1} parent=1 // pred_check
      _
    $region23: #{tpu_custom_call.1} parent=1 // pred_check_branch
      %57 = sbr.rel (0) target = $region25
    $region24: #{tpu_custom_call.1} parent=1 // pred_region
      _
    $region25: #{tpu_custom_call.1} parent=1 // pred_fallthru
      _
    // Predicated region
    $region26: #{tpu_custom_call.1} parent=1 // pred_check
      _
    $region27: #{tpu_custom_call.1} parent=1 // pred_check_branch
      %59 = sbr.rel (0) target = $region29
    $region28: #{tpu_custom_call.1} parent=1 // pred_region
      _
    $region29: #{tpu_custom_call.1} parent=1 // pred_fallthru
      _
    // Predicated region
    $region30: #{tpu_custom_call.1} parent=1 // pred_check
      _
    $region31: #{tpu_custom_call.1} parent=1 // pred_check_branch
      %61 = sbr.rel (0) target = $region33
    $region32: #{tpu_custom_call.1} parent=1 // pred_region
      %62 = dma.done [#allocation4], 1792
    $region33: #{tpu_custom_call.1} parent=1 // pred_fallthru
      _
    // Predicated region
    $region34: #{tpu_custom_call.1} parent=1 // pred_check
      _
    $region35: #{tpu_custom_call.1} parent=1 // pred_check_branch
      %64 = sbr.rel (0) target = $region37
    $region36: #{tpu_custom_call.1} parent=1 // pred_region
      %65 = dma.done [#allocation7], 12544
    $region37: #{tpu_custom_call.1} parent=1 // pred_fallthru
      _
    // Predicated region
    $region38: #{tpu_custom_call.1} parent=1 // pred_check
      _
    $region39: #{tpu_custom_call.1} parent=1 // pred_check_branch
      %67 = sbr.rel (0) target = $region41
    $region40: #{tpu_custom_call.1} parent=1 // pred_region
      %68 = dma.done [#allocation7], 4096
    $region41: #{tpu_custom_call.1} parent=1 // pred_fallthru
      _
    %v70 = vld [vmem:[#allocation3] sm:$0xff]
    %v71 = vld [vmem:[#allocation3 + $0x8] sm:$0xff]
    %v72 = vld [vmem:[#allocation3 + $0x10] sm:$0xff]
    %v73 = vld [vmem:[#allocation3 + $0x18] sm:$0xf]
    %v74 = vld [vmem:[#allocation3 + $0x1c] sm:$0xff]
    %v75 = vld [vmem:[#allocation3 + $0x24] sm:$0xff]
    %v76 = vld [vmem:[#allocation3 + $0x2c] sm:$0xff]
    %v77 = vld [vmem:[#allocation3 + $0x34] sm:$0xf]
    %v78 = vld [vmem:[#allocation3 + $0x38] sm:$0xff]
    %v79 = vld [vmem:[#allocation3 + $0x40] sm:$0xff]
    %v80 = vld [vmem:[#allocation3 + $0x48] sm:$0xff]
    %v81 = vld [vmem:[#allocation3 + $0x50] sm:$0xf]
    %v82 = vld [vmem:[#allocation3 + $0x54] sm:$0xff]
    %v83 = vld [vmem:[#allocation3 + $0x5c] sm:$0xff]
    %v84 = vld [vmem:[#allocation3 + $0x64] sm:$0xff]
    %v85 = vld [vmem:[#allocation3 + $0x6c] sm:$0xf]
    %v86 = vld [vmem:[#allocation6] sm:$0xff]
    %v87 = vld [vmem:[#allocation6 + $0x8] sm:$0xff]
    %v88 = vld [vmem:[#allocation6 + $0x10] sm:$0xff]
    %v89 = vld [vmem:[#allocation6 + $0x18] sm:$0xff]
    %v90 = vld [vmem:[#allocation6 + $0x20] sm:$0xff]
    %v91 = vld [vmem:[#allocation6 + $0x28] sm:$0xff]
    %v92 = vld [vmem:[#allocation6 + $0x30] sm:$0xff]
    %v93 = vld [vmem:[#allocation6 + $0x38] sm:$0xff]
    %v94 = vld [vmem:[#allocation6 + $0x40] sm:$0xff]
    %v95 = vld [vmem:[#allocation6 + $0x48] sm:$0xff]
    %v96 = vld [vmem:[#allocation6 + $0x50] sm:$0xff]
    %v97 = vld [vmem:[#allocation6 + $0x58] sm:$0xff]
    %v98 = vld [vmem:[#allocation6 + $0x60] sm:$0xff]
    %v99 = vld [vmem:[#allocation6 + $0x68] sm:$0xff]
    %v100 = vld [vmem:[#allocation6 + $0x70] sm:$0xff]
    %v101 = vld [vmem:[#allocation6 + $0x78] sm:$0xff]
    %v102 = vld [vmem:[#allocation6 + $0x80] sm:$0xff]
    %v103 = vld [vmem:[#allocation6 + $0x88] sm:$0xff]
    %v104 = vld [vmem:[#allocation6 + $0x90] sm:$0xff]
    %v105 = vld [vmem:[#allocation6 + $0x98] sm:$0xff]
    %v106 = vld [vmem:[#allocation6 + $0xa0] sm:$0xff]
    %v107 = vld [vmem:[#allocation6 + $0xa8] sm:$0xff]
    %v108 = vld [vmem:[#allocation6 + $0xb0] sm:$0xff]
    %v109 = vld [vmem:[#allocation6 + $0xb8] sm:$0xff]
    %v110 = vld [vmem:[#allocation6 + $0xc0] sm:$0xff]
    %v111 = vld [vmem:[#allocation6 + $0xc8] sm:$0xff]
    %v112 = vld [vmem:[#allocation6 + $0xd0] sm:$0xff]
    %v113 = vld [vmem:[#allocation6 + $0xd8] sm:$0xff]
    %v114 = vld [vmem:[#allocation6 + $0xe0] sm:$0xff]
    %v115 = vld [vmem:[#allocation6 + $0xe8] sm:$0xff]
    %v116 = vld [vmem:[#allocation6 + $0xf0] sm:$0xff]
    %v117 = vld [vmem:[#allocation6 + $0xf8] sm:$0xff]
    %v118 = vld [vmem:[#allocation6 + $0x100] sm:$0xff]
    %v119 = vld [vmem:[#allocation6 + $0x108] sm:$0xff]
    %v120 = vld [vmem:[#allocation6 + $0x110] sm:$0xff]
    %v121 = vld [vmem:[#allocation6 + $0x118] sm:$0xff]
    %v122 = vld [vmem:[#allocation6 + $0x120] sm:$0xff]
    %v123 = vld [vmem:[#allocation6 + $0x128] sm:$0xff]
    %v124 = vld [vmem:[#allocation6 + $0x130] sm:$0xff]
    %v125 = vld [vmem:[#allocation6 + $0x138] sm:$0xff]
    %v126 = vld [vmem:[#allocation6 + $0x140] sm:$0xff]
    %v127 = vld [vmem:[#allocation6 + $0x148] sm:$0xff]
    %v128 = vld [vmem:[#allocation6 + $0x150] sm:$0xff]
    %v129 = vld [vmem:[#allocation6 + $0x158] sm:$0xff]
    %v130 = vld [vmem:[#allocation6 + $0x160] sm:$0xff]
    %v131 = vld [vmem:[#allocation6 + $0x168] sm:$0xff]
    %v132 = vld [vmem:[#allocation6 + $0x170] sm:$0xff]
    %v133 = vld [vmem:[#allocation6 + $0x178] sm:$0xff]
    %v134 = vld [vmem:[#allocation6 + $0x180] sm:$0xff]
    %v135 = vld [vmem:[#allocation6 + $0x188] sm:$0xff]
    %v136 = vld [vmem:[#allocation6 + $0x190] sm:$0xff]
    %v137 = vld [vmem:[#allocation6 + $0x198] sm:$0xff]
    %v138 = vld [vmem:[#allocation6 + $0x1a0] sm:$0xff]
    %v139 = vld [vmem:[#allocation6 + $0x1a8] sm:$0xff]
    %v140 = vld [vmem:[#allocation6 + $0x1b0] sm:$0xff]
    %v141 = vld [vmem:[#allocation6 + $0x1b8] sm:$0xff]
    %v142 = vld [vmem:[#allocation6 + $0x1c0] sm:$0xff]
    %v143 = vld [vmem:[#allocation6 + $0x1c8] sm:$0xff]
    %v144 = vld [vmem:[#allocation6 + $0x1d0] sm:$0xff]
    %v145 = vld [vmem:[#allocation6 + $0x1d8] sm:$0xff]
    %v146 = vld [vmem:[#allocation6 + $0x1e0] sm:$0xff]
    %v147 = vld [vmem:[#allocation6 + $0x1e8] sm:$0xff]
    %v148 = vld [vmem:[#allocation6 + $0x1f0] sm:$0xff]
    %v149 = vld [vmem:[#allocation6 + $0x1f8] sm:$0xff]
    %v150 = vld [vmem:[#allocation6 + $0x200] sm:$0xff]
    %v151 = vld [vmem:[#allocation6 + $0x208] sm:$0xff]
    %v152 = vld [vmem:[#allocation6 + $0x210] sm:$0xff]
    %v153 = vld [vmem:[#allocation6 + $0x218] sm:$0xff]
    %v154 = vld [vmem:[#allocation6 + $0x220] sm:$0xff]
    %v155 = vld [vmem:[#allocation6 + $0x228] sm:$0xff]
    %v156 = vld [vmem:[#allocation6 + $0x230] sm:$0xff]
    %v157 = vld [vmem:[#allocation6 + $0x238] sm:$0xff]
    %v158 = vld [vmem:[#allocation6 + $0x240] sm:$0xff]
    %v159 = vld [vmem:[#allocation6 + $0x248] sm:$0xff]
    %v160 = vld [vmem:[#allocation6 + $0x250] sm:$0xff]
    %v161 = vld [vmem:[#allocation6 + $0x258] sm:$0xff]
    %v162 = vld [vmem:[#allocation6 + $0x260] sm:$0xff]
    %v163 = vld [vmem:[#allocation6 + $0x268] sm:$0xff]
    %v164 = vld [vmem:[#allocation6 + $0x270] sm:$0xff]
    %v165 = vld [vmem:[#allocation6 + $0x278] sm:$0xff]
    %v166 = vld [vmem:[#allocation6 + $0x280] sm:$0xff]
    %v167 = vld [vmem:[#allocation6 + $0x288] sm:$0xff]
    %v168 = vld [vmem:[#allocation6 + $0x290] sm:$0xff]
    %v169 = vld [vmem:[#allocation6 + $0x298] sm:$0xff]
    %v170 = vld [vmem:[#allocation6 + $0x2a0] sm:$0xff]
    %v171 = vld [vmem:[#allocation6 + $0x2a8] sm:$0xff]
    %v172 = vld [vmem:[#allocation6 + $0x2b0] sm:$0xff]
    %v173 = vld [vmem:[#allocation6 + $0x2b8] sm:$0xff]
    %v174 = vld [vmem:[#allocation6 + $0x2c0] sm:$0xff]
    %v175 = vld [vmem:[#allocation6 + $0x2c8] sm:$0xff]
    %v176 = vld [vmem:[#allocation6 + $0x2d0] sm:$0xff]
    %v177 = vld [vmem:[#allocation6 + $0x2d8] sm:$0xff]
    %v178 = vld [vmem:[#allocation6 + $0x2e0] sm:$0xff]
    %v179 = vld [vmem:[#allocation6 + $0x2e8] sm:$0xff]
    %v180 = vld [vmem:[#allocation6 + $0x2f0] sm:$0xff]
    %v181 = vld [vmem:[#allocation6 + $0x2f8] sm:$0xff]
    %v182 = vld [vmem:[#allocation6 + $0x300] sm:$0xff]
    %v183 = vld [vmem:[#allocation6 + $0x308] sm:$0xff]
    %v184 = vld [vmem:[%s2] sm:$0x3]
    %v186 = vlaneseq
    %v187 = vshrl.u32 %v186, 7
    %v188 = vsub.s32 0, %v187
    %v189 = vrot.slane %v184, %v188
    %v190 = vlaneseq
    %v191 = vshrl.u32 %v190, 7
    %v192 = vsub.s32 1, %v191
    %v193 = vrot.slane %v184, %v192
    %v212 = vunpack.c.l.b16 %v70
    %v213 = vunpack.c.h.b16 %v70
    %v214 = vunpack.c.l.b16 %v71
    %v215 = vunpack.c.h.b16 %v71
    %v216 = vunpack.c.l.b16 %v72
    %v217 = vunpack.c.h.b16 %v72
    %v218 = vunpack.c.l.b16 %v73
    %v219 = vunpack.c.l.b16 %v74
    %v220 = vunpack.c.h.b16 %v74
    %v221 = vunpack.c.l.b16 %v75
    %v222 = vunpack.c.h.b16 %v75
    %v223 = vunpack.c.l.b16 %v76
    %v224 = vunpack.c.h.b16 %v76
    %v225 = vunpack.c.l.b16 %v77
    %v226 = vunpack.c.l.b16 %v78
    %v227 = vunpack.c.h.b16 %v78
    %v228 = vunpack.c.l.b16 %v79
    %v229 = vunpack.c.h.b16 %v79
    %v230 = vunpack.c.l.b16 %v80
    %v231 = vunpack.c.h.b16 %v80
    %v232 = vunpack.c.l.b16 %v81
    %v233 = vunpack.c.l.b16 %v82
    %v234 = vunpack.c.h.b16 %v82
    %v235 = vunpack.c.l.b16 %v83
    %v236 = vunpack.c.h.b16 %v83
    %v237 = vunpack.c.l.b16 %v84
    %v238 = vunpack.c.h.b16 %v84
    %v239 = vunpack.c.l.b16 %v85
    %v240 = vpack.c.b16 %v219, %v212
    %v241 = vpack.c.b16 %v220, %v213
    %v242 = vpack.c.b16 %v221, %v214
    %v243 = vpack.c.b16 %v222, %v215
    %v244 = vpack.c.b16 %v223, %v216
    %v245 = vpack.c.b16 %v224, %v217
    %v246 = vpack.c.b16 %v225, %v218
    %v247 = vpack.c.b16 %v233, %v226
    %v248 = vpack.c.b16 %v234, %v227
    %v249 = vpack.c.b16 %v235, %v228
    %v250 = vpack.c.b16 %v236, %v229
    %v251 = vpack.c.b16 %v237, %v230
    %v252 = vpack.c.b16 %v238, %v231
    %v253 = vpack.c.b16 %v239, %v232
    %v364 = vunpack.c.l.b16 %v86
    %v365 = vunpack.c.h.b16 %v86
    %v366 = vunpack.c.l.b16 %v87
    %v367 = vunpack.c.h.b16 %v87
    %v368 = vunpack.c.l.b16 %v88
    %v369 = vunpack.c.h.b16 %v88
    %v370 = vunpack.c.l.b16 %v89
    %v371 = vunpack.c.h.b16 %v89
    %v372 = vunpack.c.l.b16 %v90
    %v373 = vunpack.c.h.b16 %v90
    %v374 = vunpack.c.l.b16 %v91
    %v375 = vunpack.c.h.b16 %v91
    %v376 = vunpack.c.l.b16 %v92
    %v377 = vunpack.c.h.b16 %v92
    %v378 = vunpack.c.l.b16 %v93
    %v379 = vunpack.c.h.b16 %v93
    %v380 = vunpack.c.l.b16 %v94
    %v381 = vunpack.c.h.b16 %v94
    %v382 = vunpack.c.l.b16 %v95
    %v383 = vunpack.c.h.b16 %v95
    %v384 = vunpack.c.l.b16 %v96
    %v385 = vunpack.c.h.b16 %v96
    %v386 = vunpack.c.l.b16 %v97
    %v387 = vunpack.c.h.b16 %v97
    %v388 = vunpack.c.l.b16 %v98
    %v389 = vunpack.c.h.b16 %v98
    %v390 = vunpack.c.l.b16 %v99
    %v391 = vunpack.c.h.b16 %v99
    %v392 = vunpack.c.l.b16 %v100
    %v393 = vunpack.c.h.b16 %v100
    %v394 = vunpack.c.l.b16 %v101
    %v395 = vunpack.c.h.b16 %v101
    %v396 = vunpack.c.l.b16 %v102
    %v397 = vunpack.c.h.b16 %v102
    %v398 = vunpack.c.l.b16 %v103
    %v399 = vunpack.c.h.b16 %v103
    %v400 = vunpack.c.l.b16 %v104
    %v401 = vunpack.c.h.b16 %v104
    %v402 = vunpack.c.l.b16 %v105
    %v403 = vunpack.c.h.b16 %v105
    %v404 = vunpack.c.l.b16 %v106
    %v405 = vunpack.c.h.b16 %v106
    %v406 = vunpack.c.l.b16 %v107
    %v407 = vunpack.c.h.b16 %v107
    %v408 = vunpack.c.l.b16 %v108
    %v409 = vunpack.c.h.b16 %v108
    %v410 = vunpack.c.l.b16 %v109
    %v411 = vunpack.c.h.b16 %v109
    %v412 = vunpack.c.l.b16 %v110
    %v413 = vunpack.c.h.b16 %v110
    %v414 = vunpack.c.l.b16 %v111
    %v415 = vunpack.c.h.b16 %v111
    %v416 = vunpack.c.l.b16 %v112
    %v417 = vunpack.c.h.b16 %v112
    %v418 = vunpack.c.l.b16 %v113
    %v419 = vunpack.c.h.b16 %v113
    %v420 = vunpack.c.l.b16 %v114
    %v421 = vunpack.c.h.b16 %v114
    %v422 = vunpack.c.l.b16 %v115
    %v423 = vunpack.c.h.b16 %v115
    %v424 = vunpack.c.l.b16 %v116
    %v425 = vunpack.c.h.b16 %v116
    %v426 = vunpack.c.l.b16 %v117
    %v427 = vunpack.c.h.b16 %v117
    %v428 = vunpack.c.l.b16 %v118
    %v429 = vunpack.c.h.b16 %v118
    %v430 = vunpack.c.l.b16 %v119
    %v431 = vunpack.c.h.b16 %v119
    %v432 = vunpack.c.l.b16 %v120
    %v433 = vunpack.c.h.b16 %v120
    %v434 = vunpack.c.l.b16 %v121
    %v435 = vunpack.c.h.b16 %v121
    %v436 = vunpack.c.l.b16 %v122
    %v437 = vunpack.c.h.b16 %v122
    %v438 = vunpack.c.l.b16 %v123
    %v439 = vunpack.c.h.b16 %v123
    %v440 = vunpack.c.l.b16 %v124
    %v441 = vunpack.c.h.b16 %v124
    %v442 = vunpack.c.l.b16 %v125
    %v443 = vunpack.c.h.b16 %v125
    %v444 = vunpack.c.l.b16 %v126
    %v445 = vunpack.c.h.b16 %v126
    %v446 = vunpack.c.l.b16 %v127
    %v447 = vunpack.c.h.b16 %v127
    %v448 = vunpack.c.l.b16 %v128
    %v449 = vunpack.c.h.b16 %v128
    %v450 = vunpack.c.l.b16 %v129
    %v451 = vunpack.c.h.b16 %v129
    %v452 = vunpack.c.l.b16 %v130
    %v453 = vunpack.c.h.b16 %v130
    %v454 = vunpack.c.l.b16 %v131
    %v455 = vunpack.c.h.b16 %v131
    %v456 = vunpack.c.l.b16 %v132
    %v457 = vunpack.c.h.b16 %v132
    %v458 = vunpack.c.l.b16 %v133
    %v459 = vunpack.c.h.b16 %v133
    %v460 = vunpack.c.l.b16 %v134
    %v461 = vunpack.c.h.b16 %v134
    %v462 = vunpack.c.l.b16 %v135
    %v463 = vunpack.c.h.b16 %v135
    %v464 = vunpack.c.l.b16 %v136
    %v465 = vunpack.c.h.b16 %v136
    %v466 = vunpack.c.l.b16 %v137
    %v467 = vunpack.c.h.b16 %v137
    %v468 = vunpack.c.l.b16 %v138
    %v469 = vunpack.c.h.b16 %v138
    %v470 = vunpack.c.l.b16 %v139
    %v471 = vunpack.c.h.b16 %v139
    %v472 = vunpack.c.l.b16 %v140
    %v473 = vunpack.c.h.b16 %v140
    %v474 = vunpack.c.l.b16 %v141
    %v475 = vunpack.c.h.b16 %v141
    %v476 = vunpack.c.l.b16 %v142
    %v477 = vunpack.c.h.b16 %v142
    %v478 = vunpack.c.l.b16 %v143
    %v479 = vunpack.c.h.b16 %v143
    %v480 = vunpack.c.l.b16 %v144
    %v481 = vunpack.c.h.b16 %v144
    %v482 = vunpack.c.l.b16 %v145
    %v483 = vunpack.c.h.b16 %v145
    %v484 = vunpack.c.l.b16 %v146
    %v485 = vunpack.c.h.b16 %v146
    %v486 = vunpack.c.l.b16 %v147
    %v487 = vunpack.c.h.b16 %v147
    %v488 = vunpack.c.l.b16 %v148
    %v489 = vunpack.c.h.b16 %v148
    %v490 = vunpack.c.l.b16 %v149
    %v491 = vunpack.c.h.b16 %v149
    %v492 = vunpack.c.l.b16 %v150
    %v493 = vunpack.c.h.b16 %v150
    %v494 = vunpack.c.l.b16 %v151
    %v495 = vunpack.c.h.b16 %v151
    %v496 = vunpack.c.l.b16 %v152
    %v497 = vunpack.c.h.b16 %v152
    %v498 = vunpack.c.l.b16 %v153
    %v499 = vunpack.c.h.b16 %v153
    %v500 = vunpack.c.l.b16 %v154
    %v501 = vunpack.c.h.b16 %v154
    %v502 = vunpack.c.l.b16 %v155
    %v503 = vunpack.c.h.b16 %v155
    %v504 = vunpack.c.l.b16 %v156
    %v505 = vunpack.c.h.b16 %v156
    %v506 = vunpack.c.l.b16 %v157
    %v507 = vunpack.c.h.b16 %v157
    %v508 = vunpack.c.l.b16 %v158
    %v509 = vunpack.c.h.b16 %v158
    %v510 = vunpack.c.l.b16 %v159
    %v511 = vunpack.c.h.b16 %v159
    %v512 = vunpack.c.l.b16 %v160
    %v513 = vunpack.c.h.b16 %v160
    %v514 = vunpack.c.l.b16 %v161
    %v515 = vunpack.c.h.b16 %v161
    %v516 = vunpack.c.l.b16 %v162
    %v517 = vunpack.c.h.b16 %v162
    %v518 = vunpack.c.l.b16 %v163
    %v519 = vunpack.c.h.b16 %v163
    %v520 = vunpack.c.l.b16 %v164
    %v521 = vunpack.c.h.b16 %v164
    %v522 = vunpack.c.l.b16 %v165
    %v523 = vunpack.c.h.b16 %v165
    %v524 = vunpack.c.l.b16 %v166
    %v525 = vunpack.c.h.b16 %v166
    %v526 = vunpack.c.l.b16 %v167
    %v527 = vunpack.c.h.b16 %v167
    %v528 = vunpack.c.l.b16 %v168
    %v529 = vunpack.c.h.b16 %v168
    %v530 = vunpack.c.l.b16 %v169
    %v531 = vunpack.c.h.b16 %v169
    %v532 = vunpack.c.l.b16 %v170
    %v533 = vunpack.c.h.b16 %v170
    %v534 = vunpack.c.l.b16 %v171
    %v535 = vunpack.c.h.b16 %v171
    %v536 = vunpack.c.l.b16 %v172
    %v537 = vunpack.c.h.b16 %v172
    %v538 = vunpack.c.l.b16 %v173
    %v539 = vunpack.c.h.b16 %v173
    %v540 = vunpack.c.l.b16 %v174
    %v541 = vunpack.c.h.b16 %v174
    %v542 = vunpack.c.l.b16 %v175
    %v543 = vunpack.c.h.b16 %v175
    %v544 = vunpack.c.l.b16 %v176
    %v545 = vunpack.c.h.b16 %v176
    %v546 = vunpack.c.l.b16 %v177
    %v547 = vunpack.c.h.b16 %v177
    %v548 = vunpack.c.l.b16 %v178
    %v549 = vunpack.c.h.b16 %v178
    %v550 = vunpack.c.l.b16 %v179
    %v551 = vunpack.c.h.b16 %v179
    %v552 = vunpack.c.l.b16 %v180
    %v553 = vunpack.c.h.b16 %v180
    %v554 = vunpack.c.l.b16 %v181
    %v555 = vunpack.c.h.b16 %v181
    %v556 = vunpack.c.l.b16 %v182
    %v557 = vunpack.c.h.b16 %v182
    %v558 = vunpack.c.l.b16 %v183
    %v559 = vunpack.c.h.b16 %v183
    %v560 = vpack.c.b16 %v366, %v364
    %v561 = vpack.c.b16 %v367, %v365
    %v562 = vpack.c.b16 %v370, %v368
    %v563 = vpack.c.b16 %v371, %v369
    %v564 = vpack.c.b16 %v374, %v372
    %v565 = vpack.c.b16 %v375, %v373
    %v566 = vpack.c.b16 %v378, %v376
    %v567 = vpack.c.b16 %v379, %v377
    %v568 = vpack.c.b16 %v382, %v380
    %v569 = vpack.c.b16 %v383, %v381
    %v570 = vpack.c.b16 %v386, %v384
    %v571 = vpack.c.b16 %v387, %v385
    %v572 = vpack.c.b16 %v390, %v388
    %v573 = vpack.c.b16 %v391, %v389
    %v574 = vpack.c.b16 %v394, %v392
    %v575 = vpack.c.b16 %v395, %v393
    %v576 = vpack.c.b16 %v398, %v396
    %v577 = vpack.c.b16 %v399, %v397
    %v578 = vpack.c.b16 %v402, %v400
    %v579 = vpack.c.b16 %v403, %v401
    %v580 = vpack.c.b16 %v406, %v404
    %v581 = vpack.c.b16 %v407, %v405
    %v582 = vpack.c.b16 %v410, %v408
    %v583 = vpack.c.b16 %v411, %v409
    %v584 = vpack.c.b16 %v414, %v412
    %v585 = vpack.c.b16 %v415, %v413
    %v586 = vpack.c.b16 %v418, %v416
    %v587 = vpack.c.b16 %v419, %v417
    %v588 = vpack.c.b16 %v422, %v420
    %v589 = vpack.c.b16 %v423, %v421
    %v590 = vpack.c.b16 %v426, %v424
    %v591 = vpack.c.b16 %v427, %v425
    %v592 = vpack.c.b16 %v430, %v428
    %v593 = vpack.c.b16 %v431, %v429
    %v594 = vpack.c.b16 %v434, %v432
    %v595 = vpack.c.b16 %v435, %v433
    %v596 = vpack.c.b16 %v438, %v436
    %v597 = vpack.c.b16 %v439, %v437
    %v598 = vpack.c.b16 %v442, %v440
    %v599 = vpack.c.b16 %v443, %v441
    %v600 = vpack.c.b16 %v446, %v444
    %v601 = vpack.c.b16 %v447, %v445
    %v602 = vpack.c.b16 %v450, %v448
    %v603 = vpack.c.b16 %v451, %v449
    %v604 = vpack.c.b16 %v454, %v452
    %v605 = vpack.c.b16 %v455, %v453
    %v606 = vpack.c.b16 %v458, %v456
    %v607 = vpack.c.b16 %v459, %v457
    %v608 = vpack.c.b16 %v462, %v460
    %v609 = vpack.c.b16 %v463, %v461
    %v610 = vpack.c.b16 %v466, %v464
    %v611 = vpack.c.b16 %v467, %v465
    %v612 = vpack.c.b16 %v470, %v468
    %v613 = vpack.c.b16 %v471, %v469
    %v614 = vpack.c.b16 %v474, %v472
    %v615 = vpack.c.b16 %v475, %v473
    %v616 = vpack.c.b16 %v478, %v476
    %v617 = vpack.c.b16 %v479, %v477
    %v618 = vpack.c.b16 %v482, %v480
    %v619 = vpack.c.b16 %v483, %v481
    %v620 = vpack.c.b16 %v486, %v484
    %v621 = vpack.c.b16 %v487, %v485
    %v622 = vpack.c.b16 %v490, %v488
    %v623 = vpack.c.b16 %v491, %v489
    %v624 = vpack.c.b16 %v494, %v492
    %v625 = vpack.c.b16 %v495, %v493
    %v626 = vpack.c.b16 %v498, %v496
    %v627 = vpack.c.b16 %v499, %v497
    %v628 = vpack.c.b16 %v502, %v500
    %v629 = vpack.c.b16 %v503, %v501
    %v630 = vpack.c.b16 %v506, %v504
    %v631 = vpack.c.b16 %v507, %v505
    %v632 = vpack.c.b16 %v510, %v508
    %v633 = vpack.c.b16 %v511, %v509
    %v634 = vpack.c.b16 %v514, %v512
    %v635 = vpack.c.b16 %v515, %v513
    %v636 = vpack.c.b16 %v518, %v516
    %v637 = vpack.c.b16 %v519, %v517
    %v638 = vpack.c.b16 %v522, %v520
    %v639 = vpack.c.b16 %v523, %v521
    %v640 = vpack.c.b16 %v526, %v524
    %v641 = vpack.c.b16 %v527, %v525
    %v642 = vpack.c.b16 %v530, %v528
    %v643 = vpack.c.b16 %v531, %v529
    %v644 = vpack.c.b16 %v534, %v532
    %v645 = vpack.c.b16 %v535, %v533
    %v646 = vpack.c.b16 %v538, %v536
    %v647 = vpack.c.b16 %v539, %v537
    %v648 = vpack.c.b16 %v542, %v540
    %v649 = vpack.c.b16 %v543, %v541
    %v650 = vpack.c.b16 %v546, %v544
    %v651 = vpack.c.b16 %v547, %v545
    %v652 = vpack.c.b16 %v550, %v548
    %v653 = vpack.c.b16 %v551, %v549
    %v654 = vpack.c.b16 %v554, %v552
    %v655 = vpack.c.b16 %v555, %v553
    %v656 = vpack.c.b16 %v558, %v556
    %v657 = vpack.c.b16 %v559, %v557
    %vm756 = vcmask 130048
    %v758 = vsel %vm756, %v246, 0
    %v761 = vsel %vm756, %v253, 0
    %763 = vmatprep.subr.bf16.mxu0 %v561
    %764 = vmatpush1.bf16.msra.mxu0 %v560
    %765 = vmatprep.subr.bf16.mxu0 %v563
    %766 = vmatpush1.bf16.msra.mxu0 %v562
    %767 = vmatprep.subr.bf16.mxu0 %v565
    %768 = vmatpush1.bf16.msra.mxu0 %v564
    %769 = vmatprep.subr.bf16.mxu0 %v567
    %770 = vmatpush1.bf16.msra.mxu0 %v566
    %771 = vmatprep.subr.bf16.mxu0 %v569
    %772 = vmatpush1.bf16.msra.mxu0 %v568
    %773 = vmatprep.subr.bf16.mxu0 %v571
    %774 = vmatpush1.bf16.msra.mxu0 %v570
    %775 = vmatprep.subr.bf16.mxu0 %v573
    %776 = vmatpush1.bf16.msra.mxu0 %v572
    %777 = vmatprep.subr.bf16.mxu0 %v575
    %778 = vmatpush1.bf16.msra.mxu0 %v574
    %779 = vmatprep.subr.bf16.mxu0 %v577
    %780 = vmatpush1.bf16.msra.mxu0 %v576
    %781 = vmatprep.subr.bf16.mxu0 %v579
    %782 = vmatpush1.bf16.msra.mxu0 %v578
    %783 = vmatprep.subr.bf16.mxu0 %v581
    %784 = vmatpush1.bf16.msra.mxu0 %v580
    %785 = vmatprep.subr.bf16.mxu0 %v583
    %786 = vmatpush1.bf16.msra.mxu0 %v582
    %787 = vmatprep.subr.bf16.mxu0 %v585
    %788 = vmatpush1.bf16.msra.mxu0 %v584
    %789 = vmatprep.subr.bf16.mxu0 %v587
    %790 = vmatpush1.bf16.msra.mxu0 %v586
    %791 = vmatprep.subr.bf16.mxu0 %v589
    %792 = vmatpush1.bf16.msra.mxu0 %v588
    %793 = vmatprep.subr.bf16.mxu0 %v591
    %794 = vmatpush1.bf16.msra.mxu0 %v590
    %795 = vmatprep.mubr.bf16.mxu0 %v241
    %796 = vmatmul.mubr.bf16.gmra.mrb[0].mxu0 %v240
    %v797 = vpop.f32.mrb[0].mxu0
    %v798 = vadd.f32 %v189, %v797
    %v799 = vpop.f32.mrb[0].mxu0
    %v800 = vadd.f32 %v193, %v799
    %v801 = vpop.f32.mrb[0].mxu0
    %v802 = vadd.f32 %v189, %v801
    %v803 = vpop.f32.mrb[0].mxu0
    %v804 = vadd.f32 %v193, %v803
    %805 = vmatprep.mubr.bf16.mxu0 %v248
    %806 = vmatmul.mubr.bf16.gmra.mrb[0].mxu0 %v247
    %v807 = vpop.f32.mrb[0].mxu0
    %v808 = vadd.f32 %v189, %v807
    %v809 = vpop.f32.mrb[0].mxu0
    %v810 = vadd.f32 %v193, %v809
    %v811 = vpop.f32.mrb[0].mxu0
    %v812 = vadd.f32 %v189, %v811
    %v813 = vpop.f32.mrb[0].mxu0
    %v814 = vadd.f32 %v193, %v813
    %815 = vdwg.mxu0
    %816 = vmatprep.subr.bf16.mxu0 %v593
    %817 = vmatpush1.bf16.msra.mxu0 %v592
    %818 = vmatprep.subr.bf16.mxu0 %v595
    %819 = vmatpush1.bf16.msra.mxu0 %v594
    %820 = vmatprep.subr.bf16.mxu0 %v597
    %821 = vmatpush1.bf16.msra.mxu0 %v596
    %822 = vmatprep.subr.bf16.mxu0 %v599
    %823 = vmatpush1.bf16.msra.mxu0 %v598
    %824 = vmatprep.subr.bf16.mxu0 %v601
    %825 = vmatpush1.bf16.msra.mxu0 %v600
    %826 = vmatprep.subr.bf16.mxu0 %v603
    %827 = vmatpush1.bf16.msra.mxu0 %v602
    %828 = vmatprep.subr.bf16.mxu0 %v605
    %829 = vmatpush1.bf16.msra.mxu0 %v604
    %830 = vmatprep.subr.bf16.mxu0 %v607
    %831 = vmatpush1.bf16.msra.mxu0 %v606
    %832 = vmatprep.subr.bf16.mxu0 %v609
    %833 = vmatpush1.bf16.msra.mxu0 %v608
    %834 = vmatprep.subr.bf16.mxu0 %v611
    %835 = vmatpush1.bf16.msra.mxu0 %v610
    %836 = vmatprep.subr.bf16.mxu0 %v613
    %837 = vmatpush1.bf16.msra.mxu0 %v612
    %838 = vmatprep.subr.bf16.mxu0 %v615
    %839 = vmatpush1.bf16.msra.mxu0 %v614
    %840 = vmatprep.subr.bf16.mxu0 %v617
    %841 = vmatpush1.bf16.msra.mxu0 %v616
    %842 = vmatprep.subr.bf16.mxu0 %v619
    %843 = vmatpush1.bf16.msra.mxu0 %v618
    %844 = vmatprep.subr.bf16.mxu0 %v621
    %845 = vmatpush1.bf16.msra.mxu0 %v620
    %846 = vmatprep.subr.bf16.mxu0 %v623
    %847 = vmatpush1.bf16.msra.mxu0 %v622
    %848 = vmatprep.mubr.bf16.mxu0 %v243
    %849 = vmatmul.mubr.bf16.gmra.mrb[0].mxu0 %v242
    %v850 = vpop.f32.mrb[0].mxu0
    %v851 = vadd.f32 %v798, %v850
    %v852 = vpop.f32.mrb[0].mxu0
    %v853 = vadd.f32 %v800, %v852
    %v854 = vpop.f32.mrb[0].mxu0
    %v855 = vadd.f32 %v802, %v854
    %v856 = vpop.f32.mrb[0].mxu0
    %v857 = vadd.f32 %v804, %v856
    %858 = vmatprep.mubr.bf16.mxu0 %v250
    %859 = vmatmul.mubr.bf16.gmra.mrb[0].mxu0 %v249
    %v860 = vpop.f32.mrb[0].mxu0
    %v861 = vadd.f32 %v808, %v860
    %v862 = vpop.f32.mrb[0].mxu0
    %v863 = vadd.f32 %v810, %v862
    %v864 = vpop.f32.mrb[0].mxu0
    %v865 = vadd.f32 %v812, %v864
    %v866 = vpop.f32.mrb[0].mxu0
    %v867 = vadd.f32 %v814, %v866
    %868 = vdwg.mxu0
    %869 = vmatprep.subr.bf16.mxu0 %v625
    %870 = vmatpush1.bf16.msra.mxu0 %v624
    %871 = vmatprep.subr.bf16.mxu0 %v627
    %872 = vmatpush1.bf16.msra.mxu0 %v626
    %873 = vmatprep.subr.bf16.mxu0 %v629
    %874 = vmatpush1.bf16.msra.mxu0 %v628
    %875 = vmatprep.subr.bf16.mxu0 %v631
    %876 = vmatpush1.bf16.msra.mxu0 %v630
    %877 = vmatprep.subr.bf16.mxu0 %v633
    %878 = vmatpush1.bf16.msra.mxu0 %v632
    %879 = vmatprep.subr.bf16.mxu0 %v635
    %880 = vmatpush1.bf16.msra.mxu0 %v634
    %881 = vmatprep.subr.bf16.mxu0 %v637
    %882 = vmatpush1.bf16.msra.mxu0 %v636
    %883 = vmatprep.subr.bf16.mxu0 %v639
    %884 = vmatpush1.bf16.msra.mxu0 %v638
    %885 = vmatprep.subr.bf16.mxu0 %v641
    %886 = vmatpush1.bf16.msra.mxu0 %v640
    %887 = vmatprep.subr.bf16.mxu0 %v643
    %888 = vmatpush1.bf16.msra.mxu0 %v642
    %889 = vmatprep.subr.bf16.mxu0 %v645
    %890 = vmatpush1.bf16.msra.mxu0 %v644
    %891 = vmatprep.subr.bf16.mxu0 %v647
    %892 = vmatpush1.bf16.msra.mxu0 %v646
    %893 = vmatprep.subr.bf16.mxu0 %v649
    %894 = vmatpush1.bf16.msra.mxu0 %v648
    %895 = vmatprep.subr.bf16.mxu0 %v651
    %896 = vmatpush1.bf16.msra.mxu0 %v650
    %897 = vmatprep.subr.bf16.mxu0 %v653
    %898 = vmatpush1.bf16.msra.mxu0 %v652
    %899 = vmatprep.subr.bf16.mxu0 %v655
    %900 = vmatpush1.bf16.msra.mxu0 %v654
    %901 = vmatprep.mubr.bf16.mxu0 %v245
    %902 = vmatmul.mubr.bf16.gmra.mrb[0].mxu0 %v244
    %v903 = vpop.f32.mrb[0].mxu0
    %v904 = vadd.f32 %v851, %v903
    %v905 = vpop.f32.mrb[0].mxu0
    %v906 = vadd.f32 %v853, %v905
    %v907 = vpop.f32.mrb[0].mxu0
    %v908 = vadd.f32 %v855, %v907
    %v909 = vpop.f32.mrb[0].mxu0
    %v910 = vadd.f32 %v857, %v909
    %911 = vmatprep.mubr.bf16.mxu0 %v252
    %912 = vmatmul.mubr.bf16.gmra.mrb[0].mxu0 %v251
    %v913 = vpop.f32.mrb[0].mxu0
    %v914 = vadd.f32 %v861, %v913
    %v915 = vpop.f32.mrb[0].mxu0
    %v916 = vadd.f32 %v863, %v915
    %v917 = vpop.f32.mrb[0].mxu0
    %v918 = vadd.f32 %v865, %v917
    %v919 = vpop.f32.mrb[0].mxu0
    %v920 = vadd.f32 %v867, %v919
    %921 = vdwg.mxu0
    %922 = vmatprep.subr.bf16.mxu0 %v657
    %923 = vmatpush1.bf16.msra.mxu0 %v656
    %924 = vmatprep.subr.bf16.mxu0 0
    %925 = vmatpush1.bf16.msra.mxu0 0
    %926 = vmatprep.subr.bf16.mxu0 0
    %927 = vmatpush1.bf16.msra.mxu0 0
    %928 = vmatprep.subr.bf16.mxu0 0
    %929 = vmatpush1.bf16.msra.mxu0 0
    %930 = vmatprep.subr.bf16.mxu0 0
    %931 = vmatpush1.bf16.msra.mxu0 0
    %932 = vmatprep.subr.bf16.mxu0 0
    %933 = vmatpush1.bf16.msra.mxu0 0
    %934 = vmatprep.subr.bf16.mxu0 0
    %935 = vmatpush1.bf16.msra.mxu0 0
    %936 = vmatprep.subr.bf16.mxu0 0
    %937 = vmatpush1.bf16.msra.mxu0 0
    %938 = vmatprep.subr.bf16.mxu0 0
    %939 = vmatpush1.bf16.msra.mxu0 0
    %940 = vmatprep.subr.bf16.mxu0 0
    %941 = vmatpush1.bf16.msra.mxu0 0
    %942 = vmatprep.subr.bf16.mxu0 0
    %943 = vmatpush1.bf16.msra.mxu0 0
    %944 = vmatprep.subr.bf16.mxu0 0
    %945 = vmatpush1.bf16.msra.mxu0 0
    %946 = vmatprep.subr.bf16.mxu0 0
    %947 = vmatpush1.bf16.msra.mxu0 0
    %948 = vmatprep.subr.bf16.mxu0 0
    %949 = vmatpush1.bf16.msra.mxu0 0
    %950 = vmatprep.subr.bf16.mxu0 0
    %951 = vmatpush1.bf16.msra.mxu0 0
    %952 = vmatprep.subr.bf16.mxu0 0
    %953 = vmatpush1.bf16.msra.mxu0 0
    %954 = vmatprep.mubr.bf16.mxu0 0
    %955 = vmatmul.mubr.bf16.gmra.mrb[0].mxu0 %v758
    %v956 = vpop.f32.mrb[0].mxu0
    %v957 = vadd.f32 %v904, %v956
    %v958 = vpop.f32.mrb[0].mxu0
    %v959 = vadd.f32 %v906, %v958
    %v960 = vpop.f32.mrb[0].mxu0
    %v961 = vadd.f32 %v908, %v960
    %v962 = vpop.f32.mrb[0].mxu0
    %v963 = vadd.f32 %v910, %v962
    %964 = vmatprep.mubr.bf16.mxu0 0
    %965 = vmatmul.mubr.bf16.gmra.mrb[0].mxu0 %v761
    %v966 = vpop.f32.mrb[0].mxu0
    %v967 = vadd.f32 %v914, %v966
    %v968 = vpop.f32.mrb[0].mxu0
    %v969 = vadd.f32 %v916, %v968
    %v970 = vpop.f32.mrb[0].mxu0
    %v971 = vadd.f32 %v918, %v970
    %v972 = vpop.f32.mrb[0].mxu0
    %v973 = vadd.f32 %v920, %v972
    %974 = vdwg.mxu0
    %vm975 = vcmp.gt.f32.partialorder %v957, 0.0
    %vm976 = vcmp.gt.f32.partialorder %v959, 0.0
    %vm977 = vcmp.gt.f32.partialorder %v961, 0.0
    %vm978 = vcmp.gt.f32.partialorder %v963, 0.0
    %vm979 = vcmp.gt.f32.partialorder %v967, 0.0
    %vm980 = vcmp.gt.f32.partialorder %v969, 0.0
    %vm981 = vcmp.gt.f32.partialorder %v971, 0.0
    %vm982 = vcmp.gt.f32.partialorder %v973, 0.0
    %v983 = vmul.f32 %v957, 0.2
    %v984 = vmul.f32 %v959, 0.2
    %v985 = vmul.f32 %v961, 0.2
    %v986 = vmul.f32 %v963, 0.2
    %v987 = vmul.f32 %v967, 0.2
    %v988 = vmul.f32 %v969, 0.2
    %v989 = vmul.f32 %v971, 0.2
    %v990 = vmul.f32 %v973, 0.2
    %v991 = vsel %vm975, %v957, %v983
    %v992 = vsel %vm976, %v959, %v984
    %v993 = vsel %vm977, %v961, %v985
    %v994 = vsel %vm978, %v963, %v986
    %v995 = vsel %vm979, %v967, %v987
    %v996 = vsel %vm980, %v969, %v988
    %v997 = vsel %vm981, %v971, %v989
    %v998 = vsel %vm982, %v973, %v990
    %v999 = vpack.c.bf16 %v993, %v991
    %v1000 = vpack.c.bf16 %v994, %v992
    %v1001 = vpack.c.bf16 %v997, %v995
    %v1002 = vpack.c.bf16 %v998, %v996
    %v1003 = vld [vmem:[#allocation8] sm:$0xff]
    %v1004 = vld [vmem:[#allocation8 + $0x8] sm:$0xff]
    %v1005 = vld [vmem:[#allocation8 + $0x10] sm:$0xff]
    %v1006 = vld [vmem:[#allocation8 + $0x18] sm:$0xff]
    %v1007 = vld [vmem:[#allocation8 + $0x20] sm:$0xff]
    %v1008 = vld [vmem:[#allocation8 + $0x28] sm:$0xff]
    %v1009 = vld [vmem:[#allocation8 + $0x30] sm:$0xff]
    %v1010 = vld [vmem:[#allocation8 + $0x38] sm:$0xff]
    %v1011 = vld [vmem:[#allocation8 + $0x40] sm:$0xff]
    %v1012 = vld [vmem:[#allocation8 + $0x48] sm:$0xff]
    %v1013 = vld [vmem:[#allocation8 + $0x50] sm:$0xff]
    %v1014 = vld [vmem:[#allocation8 + $0x58] sm:$0xff]
    %v1015 = vld [vmem:[#allocation8 + $0x60] sm:$0xff]
    %v1016 = vld [vmem:[#allocation8 + $0x68] sm:$0xff]
    %v1017 = vld [vmem:[#allocation8 + $0x70] sm:$0xff]
    %v1018 = vld [vmem:[#allocation8 + $0x78] sm:$0xff]
    %v1019 = vld [vmem:[#allocation8 + $0x80] sm:$0xff]
    %v1020 = vld [vmem:[#allocation8 + $0x88] sm:$0xff]
    %v1021 = vld [vmem:[#allocation8 + $0x90] sm:$0xff]
    %v1022 = vld [vmem:[#allocation8 + $0x98] sm:$0xff]
    %v1023 = vld [vmem:[#allocation8 + $0xa0] sm:$0xff]
    %v1024 = vld [vmem:[#allocation8 + $0xa8] sm:$0xff]
    %v1025 = vld [vmem:[#allocation8 + $0xb0] sm:$0xff]
    %v1026 = vld [vmem:[#allocation8 + $0xb8] sm:$0xff]
    %v1027 = vld [vmem:[#allocation8 + $0xc0] sm:$0xff]
    %v1028 = vld [vmem:[#allocation8 + $0xc8] sm:$0xff]
    %v1029 = vld [vmem:[#allocation8 + $0xd0] sm:$0xff]
    %v1030 = vld [vmem:[#allocation8 + $0xd8] sm:$0xff]
    %v1031 = vld [vmem:[#allocation8 + $0xe0] sm:$0xff]
    %v1032 = vld [vmem:[#allocation8 + $0xe8] sm:$0xff]
    %v1033 = vld [vmem:[#allocation8 + $0xf0] sm:$0xff]
    %v1034 = vld [vmem:[#allocation8 + $0xf8] sm:$0xff]
    %v1035 = vld [vmem:[%s4] sm:$0x3]
    %v1037 = vlaneseq
    %v1038 = vshrl.u32 %v1037, 7
    %v1039 = vsub.s32 0, %v1038
    %v1040 = vrot.slane %v1035, %v1039
    %v1041 = vlaneseq
    %v1042 = vshrl.u32 %v1041, 7
    %v1043 = vsub.s32 1, %v1042
    %v1044 = vrot.slane %v1035, %v1043
    %v1079 = vunpack.c.l.b16 %v1003
    %v1080 = vunpack.c.h.b16 %v1003
    %v1081 = vunpack.c.l.b16 %v1004
    %v1082 = vunpack.c.h.b16 %v1004
    %v1083 = vunpack.c.l.b16 %v1005
    %v1084 = vunpack.c.h.b16 %v1005
    %v1085 = vunpack.c.l.b16 %v1006
    %v1086 = vunpack.c.h.b16 %v1006
    %v1087 = vunpack.c.l.b16 %v1007
    %v1088 = vunpack.c.h.b16 %v1007
    %v1089 = vunpack.c.l.b16 %v1008
    %v1090 = vunpack.c.h.b16 %v1008
    %v1091 = vunpack.c.l.b16 %v1009
    %v1092 = vunpack.c.h.b16 %v1009
    %v1093 = vunpack.c.l.b16 %v1010
    %v1094 = vunpack.c.h.b16 %v1010
    %v1095 = vunpack.c.l.b16 %v1011
    %v1096 = vunpack.c.h.b16 %v1011
    %v1097 = vunpack.c.l.b16 %v1012
    %v1098 = vunpack.c.h.b16 %v1012
    %v1099 = vunpack.c.l.b16 %v1013
    %v1100 = vunpack.c.h.b16 %v1013
    %v1101 = vunpack.c.l.b16 %v1014
    %v1102 = vunpack.c.h.b16 %v1014
    %v1103 = vunpack.c.l.b16 %v1015
    %v1104 = vunpack.c.h.b16 %v1015
    %v1105 = vunpack.c.l.b16 %v1016
    %v1106 = vunpack.c.h.b16 %v1016
    %v1107 = vunpack.c.l.b16 %v1017
    %v1108 = vunpack.c.h.b16 %v1017
    %v1109 = vunpack.c.l.b16 %v1018
    %v1110 = vunpack.c.h.b16 %v1018
    %v1111 = vunpack.c.l.b16 %v1019
    %v1112 = vunpack.c.h.b16 %v1019
    %v1113 = vunpack.c.l.b16 %v1020
    %v1114 = vunpack.c.h.b16 %v1020
    %v1115 = vunpack.c.l.b16 %v1021
    %v1116 = vunpack.c.h.b16 %v1021
    %v1117 = vunpack.c.l.b16 %v1022
    %v1118 = vunpack.c.h.b16 %v1022
    %v1119 = vunpack.c.l.b16 %v1023
    %v1120 = vunpack.c.h.b16 %v1023
    %v1121 = vunpack.c.l.b16 %v1024
    %v1122 = vunpack.c.h.b16 %v1024
    %v1123 = vunpack.c.l.b16 %v1025
    %v1124 = vunpack.c.h.b16 %v1025
    %v1125 = vunpack.c.l.b16 %v1026
    %v1126 = vunpack.c.h.b16 %v1026
    %v1127 = vunpack.c.l.b16 %v1027
    %v1128 = vunpack.c.h.b16 %v1027
    %v1129 = vunpack.c.l.b16 %v1028
    %v1130 = vunpack.c.h.b16 %v1028
    %v1131 = vunpack.c.l.b16 %v1029
    %v1132 = vunpack.c.h.b16 %v1029
    %v1133 = vunpack.c.l.b16 %v1030
    %v1134 = vunpack.c.h.b16 %v1030
    %v1135 = vunpack.c.l.b16 %v1031
    %v1136 = vunpack.c.h.b16 %v1031
    %v1137 = vunpack.c.l.b16 %v1032
    %v1138 = vunpack.c.h.b16 %v1032
    %v1139 = vunpack.c.l.b16 %v1033
    %v1140 = vunpack.c.h.b16 %v1033
    %v1141 = vunpack.c.l.b16 %v1034
    %v1142 = vunpack.c.h.b16 %v1034
    %v1143 = vpack.c.b16 %v1081, %v1079
    %v1144 = vpack.c.b16 %v1082, %v1080
    %v1145 = vpack.c.b16 %v1085, %v1083
    %v1146 = vpack.c.b16 %v1086, %v1084
    %v1147 = vpack.c.b16 %v1089, %v1087
    %v1148 = vpack.c.b16 %v1090, %v1088
    %v1149 = vpack.c.b16 %v1093, %v1091
    %v1150 = vpack.c.b16 %v1094, %v1092
    %v1151 = vpack.c.b16 %v1097, %v1095
    %v1152 = vpack.c.b16 %v1098, %v1096
    %v1153 = vpack.c.b16 %v1101, %v1099
    %v1154 = vpack.c.b16 %v1102, %v1100
    %v1155 = vpack.c.b16 %v1105, %v1103
    %v1156 = vpack.c.b16 %v1106, %v1104
    %v1157 = vpack.c.b16 %v1109, %v1107
    %v1158 = vpack.c.b16 %v1110, %v1108
    %v1159 = vpack.c.b16 %v1113, %v1111
    %v1160 = vpack.c.b16 %v1114, %v1112
    %v1161 = vpack.c.b16 %v1117, %v1115
    %v1162 = vpack.c.b16 %v1118, %v1116
    %v1163 = vpack.c.b16 %v1121, %v1119
    %v1164 = vpack.c.b16 %v1122, %v1120
    %v1165 = vpack.c.b16 %v1125, %v1123
    %v1166 = vpack.c.b16 %v1126, %v1124
    %v1167 = vpack.c.b16 %v1129, %v1127
    %v1168 = vpack.c.b16 %v1130, %v1128
    %v1169 = vpack.c.b16 %v1133, %v1131
    %v1170 = vpack.c.b16 %v1134, %v1132
    %v1171 = vpack.c.b16 %v1137, %v1135
    %v1172 = vpack.c.b16 %v1138, %v1136
    %v1173 = vpack.c.b16 %v1141, %v1139
    %v1174 = vpack.c.b16 %v1142, %v1140
    %1207 = vmatprep.subr.bf16.mxu0 %v1144
    %1208 = vmatpush1.bf16.msra.mxu0 %v1143
    %1209 = vmatprep.subr.bf16.mxu0 %v1146
    %1210 = vmatpush1.bf16.msra.mxu0 %v1145
    %1211 = vmatprep.subr.bf16.mxu0 %v1148
    %1212 = vmatpush1.bf16.msra.mxu0 %v1147
    %1213 = vmatprep.subr.bf16.mxu0 %v1150
    %1214 = vmatpush1.bf16.msra.mxu0 %v1149
    %1215 = vmatprep.subr.bf16.mxu0 %v1152
    %1216 = vmatpush1.bf16.msra.mxu0 %v1151
    %1217 = vmatprep.subr.bf16.mxu0 %v1154
    %1218 = vmatpush1.bf16.msra.mxu0 %v1153
    %1219 = vmatprep.subr.bf16.mxu0 %v1156
    %1220 = vmatpush1.bf16.msra.mxu0 %v1155
    %1221 = vmatprep.subr.bf16.mxu0 %v1158
    %1222 = vmatpush1.bf16.msra.mxu0 %v1157
    %1223 = vmatprep.subr.bf16.mxu0 %v1160
    %1224 = vmatpush1.bf16.msra.mxu0 %v1159
    %1225 = vmatprep.subr.bf16.mxu0 %v1162
    %1226 = vmatpush1.bf16.msra.mxu0 %v1161
    %1227 = vmatprep.subr.bf16.mxu0 %v1164
    %1228 = vmatpush1.bf16.msra.mxu0 %v1163
    %1229 = vmatprep.subr.bf16.mxu0 %v1166
    %1230 = vmatpush1.bf16.msra.mxu0 %v1165
    %1231 = vmatprep.subr.bf16.mxu0 %v1168
    %1232 = vmatpush1.bf16.msra.mxu0 %v1167
    %1233 = vmatprep.subr.bf16.mxu0 %v1170
    %1234 = vmatpush1.bf16.msra.mxu0 %v1169
    %1235 = vmatprep.subr.bf16.mxu0 %v1172
    %1236 = vmatpush1.bf16.msra.mxu0 %v1171
    %1237 = vmatprep.subr.bf16.mxu0 %v1174
    %1238 = vmatpush1.bf16.msra.mxu0 %v1173
    %1239 = vmatprep.mubr.bf16.mxu0 %v1000
    %1240 = vmatmul.mubr.bf16.gmra.mrb[0].mxu0 %v999
    %v1241 = vpop.f32.mrb[0].mxu0
    %v1242 = vadd.f32 %v1040, %v1241
    %v1243 = vpop.f32.mrb[0].mxu0
    %v1244 = vadd.f32 %v1044, %v1243
    %v1245 = vpop.f32.mrb[0].mxu0
    %v1246 = vadd.f32 %v1040, %v1245
    %v1247 = vpop.f32.mrb[0].mxu0
    %v1248 = vadd.f32 %v1044, %v1247
    %1249 = vmatprep.mubr.bf16.mxu0 %v1002
    %1250 = vmatmul.mubr.bf16.gmra.mrb[0].mxu0 %v1001
    %v1251 = vpop.f32.mrb[0].mxu0
    %v1252 = vadd.f32 %v1040, %v1251
    %v1253 = vpop.f32.mrb[0].mxu0
    %v1254 = vadd.f32 %v1044, %v1253
    %v1255 = vpop.f32.mrb[0].mxu0
    %v1256 = vadd.f32 %v1040, %v1255
    %v1257 = vpop.f32.mrb[0].mxu0
    %v1258 = vadd.f32 %v1044, %v1257
    %1259 = vdwg.mxu0
    %vm1260 = vcmp.gt.f32.partialorder %v1242, 0.0
    %vm1261 = vcmp.gt.f32.partialorder %v1244, 0.0
    %vm1262 = vcmp.gt.f32.partialorder %v1246, 0.0
    %vm1263 = vcmp.gt.f32.partialorder %v1248, 0.0
    %vm1264 = vcmp.gt.f32.partialorder %v1252, 0.0
    %vm1265 = vcmp.gt.f32.partialorder %v1254, 0.0
    %vm1266 = vcmp.gt.f32.partialorder %v1256, 0.0
    %vm1267 = vcmp.gt.f32.partialorder %v1258, 0.0
    %v1268 = vmul.f32 %v1242, 0.2
    %v1269 = vmul.f32 %v1244, 0.2
    %v1270 = vmul.f32 %v1246, 0.2
    %v1271 = vmul.f32 %v1248, 0.2
    %v1272 = vmul.f32 %v1252, 0.2
    %v1273 = vmul.f32 %v1254, 0.2
    %v1274 = vmul.f32 %v1256, 0.2
    %v1275 = vmul.f32 %v1258, 0.2
    %v1276 = vsel %vm1260, %v1242, %v1268
    %v1277 = vsel %vm1261, %v1244, %v1269
    %v1278 = vsel %vm1262, %v1246, %v1270
    %v1279 = vsel %vm1263, %v1248, %v1271
    %v1280 = vsel %vm1264, %v1252, %v1272
    %v1281 = vsel %vm1265, %v1254, %v1273
    %v1282 = vsel %vm1266, %v1256, %v1274
    %v1283 = vsel %vm1267, %v1258, %v1275
    %v1284 = vld [vmem:[%s5] sm:$0x3]
    %v1285 = vpack.c.bf16 %v1278, %v1276
    %v1286 = vpack.c.bf16 %v1279, %v1277
    %v1287 = vpack.c.bf16 %v1282, %v1280
    %v1288 = vpack.c.bf16 %v1283, %v1281
    %s1289 = sld [smem:[#allocation2]]
    %v1290 = vstv %s1289
    %v1293 = vunpack.c.l.s4 1966171168
    %v1294 = vunpack.c.0.s8 %v1293
    %v1295 = vlaneseq
    %v1296 = vshrl.u32 %v1295, 7
    %v1297 = vsub.s32 %v1294, %v1296
    %v1298 = vrot.slane %v1284, %v1297
    %v1299 = vcombine.high %v1298, %v1298
    %v1301 = vunpack.c.l.s4 1966171168
    %v1302 = vunpack.c.0.s8 %v1301
    %v1303 = vlaneseq
    %v1304 = vshrl.u32 %v1303, 7
    %v1305 = vsub.s32 %v1302, %v1304
    %v1306 = vrot.slane %v1298, %v1305
    %v1308 = vunpack.c.l.s4 1966171168
    %v1309 = vunpack.c.0.s8 %v1308
    %v1310 = vlaneseq
    %v1311 = vshrl.u32 %v1310, 7
    %v1312 = vsub.s32 %v1309, %v1311
    %v1313 = vrot.slane %v1299, %v1312
    %1316 = vmatprep.subr.bf16.mxu0 %v1286
    %1317 = vmatpush1.bf16.xpose.msra.mxu0 %v1285
    %1318 = vmatprep.subr.bf16.mxu0 %v1288
    %1319 = vmatpush1.bf16.xpose.msra.mxu0 %v1287
    %1320 = vmatprep.subr.bf16.mxu0 0
    %1321 = vmatpush1.bf16.xpose.msra.mxu0 0
    %1322 = vmatprep.subr.bf16.mxu0 0
    %1323 = vmatpush1.bf16.xpose.msra.mxu0 0
    %1324 = vmatprep.subr.bf16.mxu0 0
    %1325 = vmatpush1.bf16.xpose.msra.mxu0 0
    %1326 = vmatprep.subr.bf16.mxu0 0
    %1327 = vmatpush1.bf16.xpose.msra.mxu0 0
    %1328 = vmatprep.subr.bf16.mxu0 0
    %1329 = vmatpush1.bf16.xpose.msra.mxu0 0
    %1330 = vmatprep.subr.bf16.mxu0 0
    %1331 = vmatpush1.bf16.xpose.msra.mxu0 0
    %1332 = vmatprep.subr.bf16.mxu0 0
    %1333 = vmatpush1.bf16.xpose.msra.mxu0 0
    %1334 = vmatprep.subr.bf16.mxu0 0
    %1335 = vmatpush1.bf16.xpose.msra.mxu0 0
    %1336 = vmatprep.subr.bf16.mxu0 0
    %1337 = vmatpush1.bf16.xpose.msra.mxu0 0
    %1338 = vmatprep.subr.bf16.mxu0 0
    %1339 = vmatpush1.bf16.xpose.msra.mxu0 0
    %1340 = vmatprep.subr.bf16.mxu0 0
    %1341 = vmatpush1.bf16.xpose.msra.mxu0 0
    %1342 = vmatprep.subr.bf16.mxu0 0
    %1343 = vmatpush1.bf16.xpose.msra.mxu0 0
    %1344 = vmatprep.subr.bf16.mxu0 0
    %1345 = vmatpush1.bf16.xpose.msra.mxu0 0
    %1346 = vmatprep.subr.bf16.mxu0 0
    %1347 = vmatpush1.bf16.xpose.msra.mxu0 0
    %1348 = vmatprep.mubr.bf16.mxu0 %v1313
    %1349 = vmatmul.mubr.bf16.gmra.mrb[0].mxu0 %v1306
    %v1350 = vpop.f32.mrb[0].mxu0
    %v1351 = vadd.f32 %v1290, %v1350
    %v1352 = vpop.f32.mrb[0].mxu0
    %v1353 = vpop.f32.mrb[0].mxu0
    %v1354 = vpop.f32.mrb[0].mxu0
    %1355 = vdwg.mxu0
    %v1356 = vand.u32 2147483647, %v1351
    %v1357 = vsub.f32 0.0, %v1356
    %v1358 = vmul.f32 %v1357, 1.442695
    %v1359 = vpow.pop %v1358
    %vm1360 = vcmp.ge.f32.partialorder %v1351, 0.0
    %v1361 = vsel %vm1360, 1.0, %v1359
    %v1362 = vadd.f32 %v1359, 1.0
    %v1363 = vrcp.pop %v1362
    %v1364 = vmul.f32 %v1361, %v1363
    %vm1365 = vcmask 253952
    %1366 = vst.msk [vmem:[#allocation9] sm:$0x1] %vm1365, %v1364
    // Predicated region
    $region42: #{tpu_custom_call.1} parent=1 // pred_check
      _
    $region43: #{tpu_custom_call.1} parent=1 // pred_check_branch
      %1368 = sbr.rel (0) target = $region45
    $region44: #{tpu_custom_call.1} parent=1 // pred_region
      %s1370 = ssub.s32 16, 16
      %1371 = vsyncadd [#allocation5], %s1370
      %s1373 = sshll.u32 [#allocation9], 4
      %s1374 = int_to_ptr.vmem [resolvable:$true] %s1373
      %1376 = dma.vmem_to_hbm [thread:$0]  %s1374, 16, %s7, [#allocation5]
    $region45: #{tpu_custom_call.1} parent=1 // pred_fallthru
      _
    // Predicated region
    $region46: #{tpu_custom_call.1} parent=1 // pred_check
      _
    $region47: #{tpu_custom_call.1} parent=1 // pred_check_branch
      %1378 = sbr.rel (0) target = $region49
    $region48: #{tpu_custom_call.1} parent=1 // pred_region
      %1379 = dma.done [#allocation5], 16
    $region49: #{tpu_custom_call.1} parent=1 // pred_fallthru
      _
    %1380 = vsyncpa [#allocation4], 1
    %1381 = vsyncpa [#allocation7], 1
    %1382 = vsyncpa [#allocation5], 1

</llo_original>
